<compile_context>
chip_gen: v7x
topology: tpu7x:2x2x1
jax: 0.10.0
libtpu: 0.0.40
codegen_flags: <defaults>
</compile_context>

<pallas_src>
import jax
import jax.numpy as jnp
from jax.experimental import pallas as pl
from jax.experimental.pallas import tpu as pltpu


def _round_up(x, m):
    return ((x + m - 1) // m) * m


def _vmem_capacity_bytes():
    """Physical VMEM per TensorCore (64 MiB on v7x, 128 MiB on v5e/v6e)."""
    try:
        info = pltpu.get_tpu_info()
        cap = int(getattr(info, "vmem_capacity_bytes", 0))
    except Exception:
        cap = 0
    return cap if cap > 0 else (64 << 20)   # conservative fallback = v7x


# ----------------------------------------------------------------------------
# Pallas kernel: hyperbolic (Poincare-ball) distance + bias sum
# ----------------------------------------------------------------------------
def _geomlc_kernel(u_ref, v_ref, b_ref, out_ref):
    # Feature-major blocks: (F, TB) with features on sublanes, batch on lanes.
    u = u_ref[...].astype(jnp.float32)
    v = v_ref[...].astype(jnp.float32)

    # Reductions over axis 0 (sublane axis): ~F/8 VPU vreg adds + one short
    # 8-sublane reduce per 128-lane column.  Results are already lane-dense.
    u_ns = jnp.sum(u * u, axis=0, keepdims=True)           # (1, TB)
    v_ns = jnp.sum(v * v, axis=0, keepdims=True)           # (1, TB)
    diff = u - v
    d_ns = jnp.sum(diff * diff, axis=0, keepdims=True)     # (1, TB)

    # Matches torch reference:
    #   dist = acosh(1 + 2*||u-v||^2 / ((1-||u||^2)(1-||v||^2) + 1e-6))
    denom = (1.0 - u_ns) * (1.0 - v_ns) + 1e-6
    d = 2.0 * d_ns / denom
    # acosh(1+d) = log(1 + d + sqrt(d*(d+2)))  -- avoids the x*x-1
    # cancellation of log(x + sqrt(x^2-1)) for small distances.  Like the
    # reference, out-of-ball inputs (d < 0) yield NaN (sqrt of a negative).
    dist = jnp.log(1.0 + d + jnp.sqrt(d * (d + 2.0)))

    # b_ref holds user_bias + item_bias + global_bias in the same lane layout.
    pred = b_ref[0] - dist                                  # (1, TB)
    out_ref[...] = pred.reshape(out_ref.shape).astype(out_ref.dtype)


# ----------------------------------------------------------------------------
# Tiling / launch helpers
# ----------------------------------------------------------------------------
def _choose_tile_b(n_factors, itemsize, batch, requested=None):
    """Batch-tile (lane) width: multiple of 128, as large as a conservative
    generation-aware VMEM budget allows (up to 8192 rows), shrinking to 128
    for very large factor counts."""
    if requested is not None:
        return max(128, (int(requested) // 128) * 128)
    budget = int(0.6 * _vmem_capacity_bytes())       # leave compiler headroom
    f_sub = _round_up(n_factors, 8)                  # sublane padding of F
    # Per batch column: 2 embedding inputs x 2 pipeline buffers, plus the
    # (8-sublane padded) f32 bias and output blocks, double-buffered.
    per_col = 2 * 2 * f_sub * itemsize + 2 * 2 * 8 * 4
    max_cols = max(budget // per_col, 128)
    tile_b = min(8192, max_cols, _round_up(batch, 128))
    tile_b = max(128, (tile_b // 128) * 128)
    # v7x megacore: if the whole batch fits one tile but is big enough to be
    # worth splitting, use two tiles so the "parallel" grid axis can shard
    # across both TensorCores (no-op on single-TC v5e/v6e).
    if batch > 256 and batch <= tile_b:
        tile_b = max(128, _round_up(-(-batch // 2), 128))
    return int(tile_b)


def _launch(u_t, v_t, bias3, n_factors, tile_b, num_tiles, itemsize):
    f_sub = _round_up(n_factors, 8)
    # Double-buffered VMEM footprint of all blocks + fixed headroom.
    block_bytes = 2 * 2 * f_sub * tile_b * itemsize + 2 * 2 * 8 * tile_b * 4
    cap = _vmem_capacity_bytes()
    vmem_limit = int(min(max(block_bytes + (4 << 20), 16 << 20),
                         (9 * cap) // 10))

    return pl.pallas_call(
        _geomlc_kernel,
        out_shape=jax.ShapeDtypeStruct((num_tiles, 1, tile_b), jnp.float32),
        grid_spec=pltpu.PrefetchScalarGridSpec(
            num_scalar_prefetch=0,
            grid=(num_tiles,),
            in_specs=[
                pl.BlockSpec((n_factors, tile_b), lambda i: (0, i)),  # user (F,B)
                pl.BlockSpec((n_factors, tile_b), lambda i: (0, i)),  # item (F,B)
                pl.BlockSpec((1, 1, tile_b), lambda i: (i, 0, 0)),    # summed bias
            ],
            out_specs=pl.BlockSpec((1, 1, tile_b), lambda i: (i, 0, 0)),
        ),
        compiler_params=pltpu.CompilerParams(
            dimension_semantics=("parallel",),
            vmem_limit_bytes=vmem_limit),
    )(u_t, v_t, bias3)


def geomlc_forward(user_emb_t, item_emb_t, user_bias, item_bias, global_bias,
                   *, tile_b=None):
    """GeoMLCModel forward (hyperbolic manifold).

    user_emb_t / item_emb_t : (F, B) feature-major embeddings (f32 or bf16).
    user_bias / item_bias   : (B,) or (B, 1) float32.
    global_bias             : (1,) float32.
    Returns predictions of shape (B,) float32.
    """
    F, B = user_emb_t.shape
    assert item_emb_t.shape == (F, B)
    itemsize = jnp.dtype(user_emb_t.dtype).itemsize

    # Pre-add the three bias terms wrapper-side -> one lane-dense bias stream.
    bias = (user_bias.reshape(-1).astype(jnp.float32)
            + item_bias.reshape(-1).astype(jnp.float32)
            + global_bias.reshape(-1)[0].astype(jnp.float32))          # (B,)

    tile_b = _choose_tile_b(F, itemsize, B, tile_b)
    num_full = B // tile_b
    rem = B - num_full * tile_b

    pieces = []
    if num_full:
        # Divisible prefix: no padding / copying of the embedding stream; the
        # grid simply covers the first num_full tiles of the original arrays.
        b_main = bias[: num_full * tile_b].reshape(num_full, 1, tile_b)
        out = _launch(user_emb_t, item_emb_t, b_main, F, tile_b, num_full,
                      itemsize)
        pieces.append(out.reshape(-1))
    if rem:
        # Ragged tail (< tile_b rows): pad only the small tail slice.
        start = num_full * tile_b
        tb_tail = _round_up(rem, 128)
        pad = tb_tail - rem
        u_tail = jnp.pad(user_emb_t[:, start:], ((0, 0), (0, pad)))
        v_tail = jnp.pad(item_emb_t[:, start:], ((0, 0), (0, pad)))
        b_tail = jnp.pad(bias[start:], (0, pad)).reshape(1, 1, tb_tail)
        out_t = _launch(u_tail, v_tail, b_tail, F, tb_tail, 1, itemsize)
        pieces.append(out_t.reshape(-1)[:rem])

    return pieces[0] if len(pieces) == 1 else jnp.concatenate(pieces)


# ----------------------------------------------------------------------------
# Parameter setup mirroring GeoMLCModel.__init__ (hyperbolic, init_range=0.1)
# ----------------------------------------------------------------------------
def init_geomlc_params(key, n_users, n_items, n_factors, init_range=0.1):
    ku, ki = jax.random.split(key)
    user_w = jax.random.uniform(ku, (n_users, n_factors), jnp.float32,
                                minval=-init_range, maxval=init_range)
    item_w = jax.random.uniform(ki, (n_items, n_factors), jnp.float32,
                                minval=-init_range, maxval=init_range)

    # project_to_manifold() for 'hyperbolic': rescale rows whose norm > 0.999
    max_norm = 0.999
    u_norm = jnp.linalg.norm(user_w, axis=1, keepdims=True)
    i_norm = jnp.linalg.norm(item_w, axis=1, keepdims=True)
    user_w = jnp.where(u_norm > max_norm, user_w * (max_norm / u_norm), user_w)
    item_w = jnp.where(i_norm > max_norm, item_w * (max_norm / i_norm), item_w)

    user_b = jnp.zeros((n_users, 1), jnp.float32)
    item_b = jnp.zeros((n_items, 1), jnp.float32)
    global_b = jnp.zeros((1,), jnp.float32)
    return user_w, item_w, user_b, item_b, global_b


def geomlc_reference(user_emb, item_emb, user_bias, item_bias, global_bias):
    """Pure-JAX reference of the PyTorch forward (hyperbolic manifold).
    user_emb/item_emb are batch-major (B, F) here."""
    u_ns = jnp.sum(user_emb ** 2, axis=-1)
    i_ns = jnp.sum(item_emb ** 2, axis=-1)
    diff_ns = jnp.sum((user_emb - item_emb) ** 2, axis=-1)
    denom = (1.0 - u_ns) * (1.0 - i_ns) + 1e-6
    dist = jnp.arccosh(1.0 + 2.0 * diff_ns / denom)
    return (-dist + user_bias[:, 0] + item_bias[:, 0] + global_bias[0])


if __name__ == "__main__":
    n_users, n_items, n_factors = 64, 96, 32
    batch = 300        # exercises both the full-tile grid and the ragged tail

    key = jax.random.PRNGKey(0)
    kparam, ku_ids, ki_ids = jax.random.split(key, 3)

    user_w, item_w, user_b, item_b, global_b = init_geomlc_params(
        kparam, n_users, n_items, n_factors)

    user_ids = jax.random.randint(ku_ids, (batch,), 0, n_users)
    item_ids = jax.random.randint(ki_ids, (batch,), 0, n_items)

    # Embedding lookups (nn.Embedding(ids)) -- glue, done in plain JAX.  The
    # tables are kept feature-major so the gathered activations are already in
    # the kernel's (F, B) layout (no transpose pass over the batch stream).
    user_w_t = user_w.T                                   # (F, n_users)
    item_w_t = item_w.T                                   # (F, n_items)
    user_emb_t = jnp.take(user_w_t, user_ids, axis=1)     # (F, B)
    item_emb_t = jnp.take(item_w_t, item_ids, axis=1)     # (F, B)
    ub = jnp.take(user_b, user_ids, axis=0)               # (B, 1)
    ib = jnp.take(item_b, item_ids, axis=0)               # (B, 1)

    # TODO(synk): training-mode interaction_matrix bookkeeping (python-side
    # stateful mutation) is not part of the numeric forward path; omitted.

    pred = geomlc_forward(user_emb_t, item_emb_t, ub, ib, global_b)
    pred = jax.block_until_ready(pred)

    ref = geomlc_reference(user_emb_t.T, item_emb_t.T, ub, ib, global_b)
    assert pred.shape == (batch,)
    assert jnp.allclose(pred, ref, atol=1e-5, rtol=1e-5), (pred, ref)

    print("KERNEL_OK")
</pallas_src>

<mosaic_0001>
module attributes {stable_mosaic.version = 11 : i64} {
  func.func @_geomlc_kernel(%arg0: i32, %arg1: memref<32x256xf32, #tpu.memory_space<vmem>>, %arg2: memref<32x256xf32, #tpu.memory_space<vmem>>, %arg3: memref<1x1x256xf32, #tpu.memory_space<vmem>>, %arg4: memref<1x1x256xf32, #tpu.memory_space<vmem>>) attributes {dimension_semantics = [#tpu.dimension_semantics<parallel>], iteration_bounds = array<i64: 1>, scalar_prefetch = 0 : i64, scratch_operands = 0 : i64, tpu.core_type = #tpu.core_type<tc>, window_params = [{transform_indices = @transform_0, window_bounds = array<i64: 32, 256>}, {transform_indices = @transform_1, window_bounds = array<i64: 32, 256>}, {transform_indices = @transform_2, window_bounds = array<i64: 1, 1, 256>}, {transform_indices = @transform_3, window_bounds = array<i64: 1, 1, 256>}]} {
    %c0 = arith.constant 0 : index
    %c0_0 = arith.constant 0 : index
    %0 = vector.load %arg1[%c0, %c0_0] : memref<32x256xf32, #tpu.memory_space<vmem>>, vector<32x256xf32>
    %c0_1 = arith.constant 0 : index
    %c0_2 = arith.constant 0 : index
    %1 = vector.load %arg2[%c0_1, %c0_2] : memref<32x256xf32, #tpu.memory_space<vmem>>, vector<32x256xf32>
    %2 = arith.mulf %0, %0 : vector<32x256xf32>
    %cst = arith.constant dense<0.000000e+00> : vector<256xf32>
    %3 = vector.multi_reduction <add>, %2, %cst [0] : vector<32x256xf32> to vector<256xf32>
    %4 = vector.shape_cast %3 : vector<256xf32> to vector<1x256xf32>
    %5 = arith.mulf %1, %1 : vector<32x256xf32>
    %cst_3 = arith.constant dense<0.000000e+00> : vector<256xf32>
    %6 = vector.multi_reduction <add>, %5, %cst_3 [0] : vector<32x256xf32> to vector<256xf32>
    %7 = vector.shape_cast %6 : vector<256xf32> to vector<1x256xf32>
    %8 = arith.subf %0, %1 : vector<32x256xf32>
    %9 = arith.mulf %8, %8 : vector<32x256xf32>
    %cst_4 = arith.constant dense<0.000000e+00> : vector<256xf32>
    %10 = vector.multi_reduction <add>, %9, %cst_4 [0] : vector<32x256xf32> to vector<256xf32>
    %11 = vector.shape_cast %10 : vector<256xf32> to vector<1x256xf32>
    %cst_5 = arith.constant 1.000000e+00 : f32
    %12 = vector.broadcast %cst_5 : f32 to vector<1x256xf32>
    %13 = arith.subf %12, %4 : vector<1x256xf32>
    %cst_6 = arith.constant 1.000000e+00 : f32
    %14 = vector.broadcast %cst_6 : f32 to vector<1x256xf32>
    %15 = arith.subf %14, %7 : vector<1x256xf32>
    %16 = arith.mulf %13, %15 : vector<1x256xf32>
    %cst_7 = arith.constant 9.99999997E-7 : f32
    %17 = vector.broadcast %cst_7 : f32 to vector<1x256xf32>
    %18 = arith.addf %16, %17 : vector<1x256xf32>
    %cst_8 = arith.constant 2.000000e+00 : f32
    %19 = vector.broadcast %cst_8 : f32 to vector<1x256xf32>
    %20 = arith.mulf %19, %11 : vector<1x256xf32>
    %21 = arith.divf %20, %18 : vector<1x256xf32>
    %cst_9 = arith.constant 1.000000e+00 : f32
    %22 = vector.broadcast %cst_9 : f32 to vector<1x256xf32>
    %23 = arith.addf %22, %21 : vector<1x256xf32>
    %cst_10 = arith.constant 2.000000e+00 : f32
    %24 = vector.broadcast %cst_10 : f32 to vector<1x256xf32>
    %25 = arith.addf %21, %24 : vector<1x256xf32>
    %26 = arith.mulf %21, %25 : vector<1x256xf32>
    %27 = math.sqrt %26 : vector<1x256xf32>
    %28 = arith.addf %23, %27 : vector<1x256xf32>
    %29 = math.log %28 : vector<1x256xf32>
    %c0_11 = arith.constant 0 : index
    %c0_12 = arith.constant 0 : index
    %c0_13 = arith.constant 0 : index
    %30 = vector.load %arg3[%c0_11, %c0_12, %c0_13] : memref<1x1x256xf32, #tpu.memory_space<vmem>>, vector<1x1x256xf32>
    %31 = vector.shape_cast %30 : vector<1x1x256xf32> to vector<1x256xf32>
    %32 = arith.subf %31, %29 : vector<1x256xf32>
    %33 = vector.shape_cast %32 : vector<1x256xf32> to vector<1x1x256xf32>
    %c0_14 = arith.constant 0 : index
    %c0_15 = arith.constant 0 : index
    %c0_16 = arith.constant 0 : index
    %34 = vector.load %arg4[%c0_14, %c0_15, %c0_16] : memref<1x1x256xf32, #tpu.memory_space<vmem>>, vector<1x1x256xf32>
    tpu.vector_store %arg4[%c0_14, %c0_15, %c0_16], %33 {strides = array<i32>} : memref<1x1x256xf32, #tpu.memory_space<vmem>>, vector<1x1x256xf32>,
    return
  }
  func.func @transform_0(%arg0: i32) -> (i32, i32) {
    %c0_i32 = arith.constant 0 : i32
    %c0_i32_0 = arith.constant 0 : i32
    return %c0_i32, %arg0 : i32, i32
  }
  func.func @transform_1(%arg0: i32) -> (i32, i32) {
    %c0_i32 = arith.constant 0 : i32
    %c0_i32_0 = arith.constant 0 : i32
    return %c0_i32, %arg0 : i32, i32
  }
  func.func @transform_2(%arg0: i32) -> (i32, i32, i32) {
    %c0_i32 = arith.constant 0 : i32
    %c0_i32_0 = arith.constant 0 : i32
    %c0_i32_1 = arith.constant 0 : i32
    return %arg0, %c0_i32, %c0_i32_0 : i32, i32, i32
  }
  func.func @transform_3(%arg0: i32) -> (i32, i32, i32) {
    %c0_i32 = arith.constant 0 : i32
    %c0_i32_0 = arith.constant 0 : i32
    %c0_i32_1 = arith.constant 0 : i32
    return %arg0, %c0_i32, %c0_i32_0 : i32, i32, i32
  }
}

</mosaic_0001>

<llo_original>
// kernel: tpu_custom_call.1
$region0: #{tpu_custom_call.1}
  #allocation0 [shape = 'u32[]', space=smem, size = 0x4, offset = 0x4, fixed_abs, tag = 'smem constant byte address 0x4 - core index']
  #allocation1 [shape = 'u32[144,128]{1,0:T(1,128)}', space=vmem, size = 0x12000, scoped, tag = 'internal scratch']
  %s0 = inlined_call_operand.hbm [shape: f32[32,300], index: 0, kind: input, shape index: {}]
  %s1 = inlined_call_operand.hbm [shape: f32[32,300], index: 1, kind: input, shape index: {}]
  %s2 = inlined_call_operand.vmem [shape: f32[1,1,256], index: 2, kind: input, shape index: {}]
  %s3 = inlined_call_operand.hbm [shape: f32[1,1,256], index: 3, kind: output, shape index: {}]
  %s4 = sld [smem:[#allocation0]]
  $region30: #{tpu_custom_call.1} parent=0
    _
  %s6 = ssub.s32 1, %s4
  %s7 = scalar_select 0, %s6, %s4
  $region1: #{tpu_custom_call.1} parent=0
    #allocation2 [shape = 'u8[32768]{0}', space=vmem, size = 0x8000, scoped, tag = 'input window, operand 0, single buffered']
    #allocation3 [shape = 's32[1]{0}', space=sflag, size = 0x4, scoped, tag = 'scoped memory for tpu_custom_call.1']
    #allocation4 [shape = 's32[1]{0}', space=sflag, size = 0x4, scoped, tag = 'scoped memory for tpu_custom_call.1']
    #allocation5 [shape = 'u8[32768]{0}', space=vmem, size = 0x8000, scoped, tag = 'input window, operand 1, single buffered']
    #allocation6 [shape = 's32[1]{0}', space=sflag, size = 0x4, scoped, tag = 'scoped memory for tpu_custom_call.1']
    #allocation7 [shape = 'u8[1024]{0}', space=vmem, size = 0x400, scoped, tag = 'output window, operand 0, single buffered']
    %8 = vsyncpa [#allocation3], 0
    %9 = vsyncpa [#allocation6], 0
    %10 = vsyncpa [#allocation4], 0
    // Predicated region
    $region2: #{tpu_custom_call.1} parent=1 // pred_check
      _
    $region3: #{tpu_custom_call.1} parent=1 // pred_check_branch
      %12 = sbr.rel (0) target = $region5
    $region4: #{tpu_custom_call.1} parent=1 // pred_region
      %s14 = ssub.s32 1024, 1024
      %15 = vsyncadd [#allocation3], %s14
      %s16 = sshll.u32 [#allocation2], 4
      %s17 = int_to_ptr.vmem [resolvable:$true] %s16
      %22 = dma.hbm_to_vmem [thread:$0]  %s0, 1024, %s17, [#allocation3], 384, 256, 16
    $region5: #{tpu_custom_call.1} parent=1 // pred_fallthru
      _
    // Predicated region
    $region6: #{tpu_custom_call.1} parent=1 // pred_check
      _
    $region7: #{tpu_custom_call.1} parent=1 // pred_check_branch
      %24 = sbr.rel (0) target = $region9
    $region8: #{tpu_custom_call.1} parent=1 // pred_region
      %s26 = ssub.s32 1024, 1024
      %27 = vsyncadd [#allocation6], %s26
      %s28 = sshll.u32 [#allocation5], 4
      %s29 = int_to_ptr.vmem [resolvable:$true] %s28
      %34 = dma.hbm_to_vmem [thread:$0]  %s1, 1024, %s29, [#allocation6], 384, 256, 16
    $region9: #{tpu_custom_call.1} parent=1 // pred_fallthru
      _
    // Predicated region
    $region10: #{tpu_custom_call.1} parent=1 // pred_check
      _
    $region11: #{tpu_custom_call.1} parent=1 // pred_check_branch
      %36 = sbr.rel (0) target = $region13
    $region12: #{tpu_custom_call.1} parent=1 // pred_region
      _
    $region13: #{tpu_custom_call.1} parent=1 // pred_fallthru
      _
    // Predicated region
    $region14: #{tpu_custom_call.1} parent=1 // pred_check
      _
    $region15: #{tpu_custom_call.1} parent=1 // pred_check_branch
      %38 = sbr.rel (0) target = $region17
    $region16: #{tpu_custom_call.1} parent=1 // pred_region
      %39 = dma.done [#allocation3], 1024
    $region17: #{tpu_custom_call.1} parent=1 // pred_fallthru
      _
    // Predicated region
    $region18: #{tpu_custom_call.1} parent=1 // pred_check
      _
    $region19: #{tpu_custom_call.1} parent=1 // pred_check_branch
      %41 = sbr.rel (0) target = $region21
    $region20: #{tpu_custom_call.1} parent=1 // pred_region
      %42 = dma.done [#allocation6], 1024
    $region21: #{tpu_custom_call.1} parent=1 // pred_fallthru
      _
    %v43 = vld [vmem:[#allocation2] sm:$0xff]
    %v44 = vld [vmem:[#allocation2 + $0x8] sm:$0xff]
    %v45 = vld [vmem:[#allocation2 + $0x10] sm:$0xff]
    %v46 = vld [vmem:[#allocation2 + $0x18] sm:$0xff]
    %v47 = vld [vmem:[#allocation2 + $0x20] sm:$0xff]
    %v48 = vld [vmem:[#allocation2 + $0x28] sm:$0xff]
    %v49 = vld [vmem:[#allocation2 + $0x30] sm:$0xff]
    %v50 = vld [vmem:[#allocation2 + $0x38] sm:$0xff]
    %v51 = vld [vmem:[#allocation5] sm:$0xff]
    %v52 = vld [vmem:[#allocation5 + $0x8] sm:$0xff]
    %v53 = vld [vmem:[#allocation5 + $0x10] sm:$0xff]
    %v54 = vld [vmem:[#allocation5 + $0x18] sm:$0xff]
    %v55 = vld [vmem:[#allocation5 + $0x20] sm:$0xff]
    %v56 = vld [vmem:[#allocation5 + $0x28] sm:$0xff]
    %v57 = vld [vmem:[#allocation5 + $0x30] sm:$0xff]
    %v58 = vld [vmem:[#allocation5 + $0x38] sm:$0xff]
    %v59 = vmul.f32 %v43, %v43
    %v60 = vmul.f32 %v44, %v44
    %v61 = vmul.f32 %v45, %v45
    %v62 = vmul.f32 %v46, %v46
    %v63 = vmul.f32 %v47, %v47
    %v64 = vmul.f32 %v48, %v48
    %v65 = vmul.f32 %v49, %v49
    %v66 = vmul.f32 %v50, %v50
    %v67 = vadd.f32 %v59, %v61
    %v68 = vadd.f32 %v67, %v63
    %v69 = vadd.f32 %v68, %v65
    %v70 = vrot.slane %v69, 4
    %v71 = vadd.f32 %v69, %v70
    %v72 = vrot.slane %v71, 2
    %v73 = vadd.f32 %v71, %v72
    %v74 = vrot.slane %v73, 1
    %v75 = vadd.f32 %v73, %v74
    %v76 = vadd.f32 %v60, %v62
    %v77 = vadd.f32 %v76, %v64
    %v78 = vadd.f32 %v77, %v66
    %v79 = vrot.slane %v78, 4
    %v80 = vadd.f32 %v78, %v79
    %v81 = vrot.slane %v80, 2
    %v82 = vadd.f32 %v80, %v81
    %v83 = vrot.slane %v82, 1
    %v84 = vadd.f32 %v82, %v83
    %v85 = vmul.f32 %v51, %v51
    %v86 = vmul.f32 %v52, %v52
    %v87 = vmul.f32 %v53, %v53
    %v88 = vmul.f32 %v54, %v54
    %v89 = vmul.f32 %v55, %v55
    %v90 = vmul.f32 %v56, %v56
    %v91 = vmul.f32 %v57, %v57
    %v92 = vmul.f32 %v58, %v58
    %v93 = vadd.f32 %v85, %v87
    %v94 = vadd.f32 %v93, %v89
    %v95 = vadd.f32 %v94, %v91
    %v96 = vrot.slane %v95, 4
    %v97 = vadd.f32 %v95, %v96
    %v98 = vrot.slane %v97, 2
    %v99 = vadd.f32 %v97, %v98
    %v100 = vrot.slane %v99, 1
    %v101 = vadd.f32 %v99, %v100
    %v102 = vadd.f32 %v86, %v88
    %v103 = vadd.f32 %v102, %v90
    %v104 = vadd.f32 %v103, %v92
    %v105 = vrot.slane %v104, 4
    %v106 = vadd.f32 %v104, %v105
    %v107 = vrot.slane %v106, 2
    %v108 = vadd.f32 %v106, %v107
    %v109 = vrot.slane %v108, 1
    %v110 = vadd.f32 %v108, %v109
    %v111 = vsub.f32 %v43, %v51
    %v112 = vsub.f32 %v44, %v52
    %v113 = vsub.f32 %v45, %v53
    %v114 = vsub.f32 %v46, %v54
    %v115 = vsub.f32 %v47, %v55
    %v116 = vsub.f32 %v48, %v56
    %v117 = vsub.f32 %v49, %v57
    %v118 = vsub.f32 %v50, %v58
    %v119 = vmul.f32 %v111, %v111
    %v120 = vmul.f32 %v112, %v112
    %v121 = vmul.f32 %v113, %v113
    %v122 = vmul.f32 %v114, %v114
    %v123 = vmul.f32 %v115, %v115
    %v124 = vmul.f32 %v116, %v116
    %v125 = vmul.f32 %v117, %v117
    %v126 = vmul.f32 %v118, %v118
    %v127 = vadd.f32 %v119, %v121
    %v128 = vadd.f32 %v127, %v123
    %v129 = vadd.f32 %v128, %v125
    %v130 = vrot.slane %v129, 4
    %v131 = vadd.f32 %v129, %v130
    %v132 = vrot.slane %v131, 2
    %v133 = vadd.f32 %v131, %v132
    %v134 = vrot.slane %v133, 1
    %v135 = vadd.f32 %v133, %v134
    %v136 = vadd.f32 %v120, %v122
    %v137 = vadd.f32 %v136, %v124
    %v138 = vadd.f32 %v137, %v126
    %v139 = vrot.slane %v138, 4
    %v140 = vadd.f32 %v138, %v139
    %v141 = vrot.slane %v140, 2
    %v142 = vadd.f32 %v140, %v141
    %v143 = vrot.slane %v142, 1
    %v144 = vadd.f32 %v142, %v143
    %v145 = vsub.f32 1.0, %v75
    %v146 = vsub.f32 1.0, %v84
    %v147 = vsub.f32 1.0, %v101
    %v148 = vsub.f32 1.0, %v110
    %v149 = vmul.f32 %v145, %v147
    %v150 = vmul.f32 %v146, %v148
    %v151 = vadd.f32 %v149, 1e-06
    %v152 = vadd.f32 %v150, 1e-06
    %v153 = vmul.f32 %v135, 2.0
    %v154 = vmul.f32 %v144, 2.0
    %v155 = vrcp.pop %v151
    %v156 = vmul.f32 %v153, %v155
    %v157 = vrcp.pop %v152
    %v158 = vmul.f32 %v154, %v157
    %v159 = vadd.f32 %v156, 1.0
    %v160 = vadd.f32 %v158, 1.0
    %v161 = vadd.f32 %v156, 2.0
    %v162 = vadd.f32 %v158, 2.0
    %v163 = vmul.f32 %v156, %v161
    %v164 = vmul.f32 %v158, %v162
    %v165 = vrsqrt.pop %v163
    %v166 = vmul.f32 %v163, %v165
    %vm167 = vcmp.eq.f32.partialorder %v163, inf
    %v168 = vsel %vm167, %v163, %v166
    %vm169 = vcmp.eq.f32.partialorder %v163, 0.0
    %v170 = vand.u32 %v163, 2147483648
    %v171 = vsel %vm169, %v170, %v168
    %v172 = vrsqrt.pop %v164
    %v173 = vmul.f32 %v164, %v172
    %vm174 = vcmp.eq.f32.partialorder %v164, inf
    %v175 = vsel %vm174, %v164, %v173
    %vm176 = vcmp.eq.f32.partialorder %v164, 0.0
    %v177 = vand.u32 %v164, 2147483648
    %v178 = vsel %vm176, %v177, %v175
    %v179 = vadd.f32 %v159, %v171
    %v180 = vadd.f32 %v160, %v178
    %v181 = vlog2.pop %v179
    %v182 = vmul.f32 %v181, 0.6931472
    %v183 = vlog2.pop %v180
    %v184 = vmul.f32 %v183, 0.6931472
    %v185 = vld [vmem:[%s2] sm:$0x3]
    %v188 = vcombine.low %v182, %v184
    %v190 = vunpack.c.l.s4 1966171168
    %v191 = vunpack.c.0.s8 %v190
    %v192 = vlaneseq
    %v193 = vshrl.u32 %v192, 7
    %v194 = vsub.s32 %v191, %v193
    %v195 = vrot.slane %v188, %v194
    %v197 = vunpack.c.l.s4 1966171168
    %v198 = vunpack.c.0.s8 %v197
    %v199 = vlaneseq
    %v200 = vshrl.u32 %v199, 7
    %v201 = vsub.s32 %v198, %v200
    %v202 = vrot.slane %v195, %v201
    %v204 = vsub.f32 %v185, %v202
    %v205 = vlaneseq
    %vm206 = vcmp.ge.s32.totalorder %v205, 0
    %vm207 = vcmp.lt.s32.totalorder %v205, 256
    %vm208 = vmand %vm206, %vm207
    %209 = vst.msk [vmem:[#allocation7] sm:$0x3] %vm208, %v204
    // Predicated region
    $region22: #{tpu_custom_call.1} parent=1 // pred_check
      _
    $region23: #{tpu_custom_call.1} parent=1 // pred_check_branch
      %211 = sbr.rel (0) target = $region25
    $region24: #{tpu_custom_call.1} parent=1 // pred_region
      %s213 = ssub.s32 32, 32
      %214 = vsyncadd [#allocation4], %s213
      %s216 = sshll.u32 [#allocation7], 4
      %s217 = int_to_ptr.vmem [resolvable:$true] %s216
      %219 = dma.vmem_to_hbm [thread:$0]  %s217, 32, %s3, [#allocation4]
    $region25: #{tpu_custom_call.1} parent=1 // pred_fallthru
      _
    // Predicated region
    $region26: #{tpu_custom_call.1} parent=1 // pred_check
      _
    $region27: #{tpu_custom_call.1} parent=1 // pred_check_branch
      %221 = sbr.rel (0) target = $region29
    $region28: #{tpu_custom_call.1} parent=1 // pred_region
      %222 = dma.done [#allocation4], 32
    $region29: #{tpu_custom_call.1} parent=1 // pred_fallthru
      _
    %223 = vsyncpa [#allocation3], 1
    %224 = vsyncpa [#allocation6], 1
    %225 = vsyncpa [#allocation4], 1

</llo_original>
